<compile_context>
chip_gen: v7x
topology: tpu7x:2x2x1
jax: 0.10.0
libtpu: 0.0.40
codegen_flags: <defaults>
</compile_context>

<pallas_src>
import functools
from typing import NamedTuple, Any

import jax
import jax.numpy as jnp
from jax import lax
from jax.experimental import pallas as pl
from jax.experimental.pallas import tpu as pltpu

LANE = 128


def _round_up(x, m):
    return (x + m - 1) // m * m


# ---------------------------------------------------------------------------
# Kernels
# ---------------------------------------------------------------------------
def _mlp_q(x, w1, b1, w2, b2, w3, b3, compute_dtype):
    """relu(relu(x@W1+b1)@W2+b2)@W3+b3.  MXU operands in `compute_dtype`,
    accumulation + bias add + ReLU in float32."""
    h1 = jnp.dot(x.astype(compute_dtype), w1, preferred_element_type=jnp.float32)
    h1 = jnp.maximum(h1 + b1, 0.0)
    h2 = jnp.dot(h1.astype(compute_dtype), w2, preferred_element_type=jnp.float32)
    h2 = jnp.maximum(h2 + b2, 0.0)
    q = jnp.dot(h2.astype(compute_dtype), w3, preferred_element_type=jnp.float32)
    return q + b3


def _fused_mlp_kernel(x_ref, w1_ref, b1_ref, w2_ref, b2_ref, w3_ref, b3_ref,
                      q_ref, *, compute_dtype):
    q = _mlp_q(x_ref[...], w1_ref[...], b1_ref[...], w2_ref[...], b2_ref[...],
               w3_ref[...], b3_ref[...], compute_dtype)
    q_ref[...] = q.astype(q_ref.dtype)          # lane-dense (TB, 128) store


def _fused_mlp_argmax_kernel(x_ref, w1_ref, b1_ref, w2_ref, b2_ref, w3_ref,
                             b3_ref, a_ref, *, compute_dtype, n_actions):
    """Forward pass + in-kernel greedy argmax over the real (unpadded) actions.

    Result is stored as a lane-dense (1, 1, TB) row (transpose rides the XLU
    slot) instead of a (TB, 1) column of masked partial stores."""
    q = _mlp_q(x_ref[...], w1_ref[...], b1_ref[...], w2_ref[...], b2_ref[...],
               w3_ref[...], b3_ref[...], compute_dtype)
    ap = q.shape[-1]
    ids = lax.broadcasted_iota(jnp.int32, q.shape, 1)
    qm = jnp.where(ids < n_actions, q, -jnp.inf)           # mask padded actions
    mx = jnp.max(qm, axis=-1, keepdims=True)
    cand = jnp.where(qm == mx, ids, jnp.int32(ap))         # first-max tie-break
    amax = jnp.min(cand, axis=-1, keepdims=True)            # (TB, 1) int32
    a_ref[...] = amax.T.reshape(a_ref.shape).astype(a_ref.dtype)


# ---------------------------------------------------------------------------
# Parameter preparation (hoisted out of the per-call hot path)
# ---------------------------------------------------------------------------
class PreparedParams(NamedTuple):
    w1: Any
    b1: Any
    w2: Any
    b2: Any
    w3: Any
    b3: Any
    input_dim: int
    hidden: int
    n_actions: int
    hp: int
    ap: int
    compute_dtype: Any


def prepare_params(params, compute_dtype=jnp.bfloat16):
    """Zero-pad weights to lane-dense (128-multiple) shapes and cast the MXU
    operands once.  Padded lanes are numerically inert (relu(0*w+0)=0)."""
    w1, b1, w2, b2, w3, b3 = params
    in_dim, hidden = w1.shape
    n_actions = w3.shape[1]
    HP = _round_up(max(hidden, LANE), LANE)
    AP = _round_up(max(n_actions, LANE), LANE)

    def pad2(a, rows, cols, dtype):
        a = jnp.asarray(a)
        if a.ndim == 1:
            a = a.reshape(1, -1)
        return jnp.pad(a, ((0, rows - a.shape[0]),
                           (0, cols - a.shape[1]))).astype(dtype)

    return PreparedParams(
        w1=pad2(w1, in_dim, HP, compute_dtype),
        b1=pad2(b1, 1, HP, jnp.float32),
        w2=pad2(w2, HP, HP, compute_dtype),
        b2=pad2(b2, 1, HP, jnp.float32),
        w3=pad2(w3, HP, AP, compute_dtype),
        b3=pad2(b3, 1, AP, jnp.float32),
        input_dim=in_dim, hidden=hidden, n_actions=n_actions,
        hp=HP, ap=AP, compute_dtype=compute_dtype)


def _as_prepared(params, compute_dtype):
    if isinstance(params, PreparedParams):
        return params
    return prepare_params(params, compute_dtype)


# ---------------------------------------------------------------------------
# Tiling / spec helpers
# ---------------------------------------------------------------------------
def _choose_batch_tiling(B, batch_tile):
    """Returns (TB, pB, n_steps).  TB is a multiple of 8, pB = TB * n_steps.
    Small batches -> single grid step (no per-step overhead).  Large batches
    -> an even number of steps so both v7x TensorCores get grid work."""
    batch_tile = max(8, _round_up(int(batch_tile), 8))
    pB8 = _round_up(max(B, 1), 8)
    if pB8 <= batch_tile:
        return pB8, pB8, 1
    n_steps = -(-pB8 // batch_tile)
    if n_steps % 2:
        n_steps += 1                      # even step count for megacore sharding
    TB = _round_up(-(-pB8 // n_steps), 8)
    return TB, TB * n_steps, n_steps


def _make_in_specs(TB, in_dim, HP, AP):
    const = lambda i: (0, 0)              # constant block index -> VMEM-resident
    return [
        pl.BlockSpec((TB, in_dim), lambda i: (i, 0)),   # x: streamed per tile
        pl.BlockSpec((in_dim, HP), const),
        pl.BlockSpec((1, HP), const),
        pl.BlockSpec((HP, HP), const),
        pl.BlockSpec((1, HP), const),
        pl.BlockSpec((HP, AP), const),
        pl.BlockSpec((1, AP), const),
    ]


def _prep_inputs(x, p, batch_tile):
    B = x.shape[0]
    TB, pB, n_steps = _choose_batch_tiling(B, batch_tile)
    x_p = x.astype(p.compute_dtype)        # bf16 input stream (half HBM bytes)
    if pB != B:
        x_p = jnp.pad(x_p, ((0, pB - B), (0, 0)))
    operands = (x_p, p.w1, p.b1, p.w2, p.b2, p.w3, p.b3)
    flops = 2 * pB * (p.input_dim * p.hp + p.hp * p.hp + p.hp * p.ap)
    in_bytes = sum(int(a.size) * a.dtype.itemsize for a in operands)
    return operands, B, TB, pB, n_steps, flops, in_bytes


# ---------------------------------------------------------------------------
# Public wrappers (Network.forward / Network.actions equivalents)
# ---------------------------------------------------------------------------
def dqn_forward(x, params, *, batch_tile=1024, compute_dtype=jnp.bfloat16,
                out_dtype=jnp.float32, trim=True):
    """Q-value forward pass.  x: (B, input_dim) -> (B, n_actions) `out_dtype`.
    `trim=False` returns only the row-sliced padded (B, 128) Q block (cheaper
    when the consumer gathers action columns itself)."""
    p = _as_prepared(params, compute_dtype)
    operands, B, TB, pB, n_steps, flops, in_bytes = _prep_inputs(x, p, batch_tile)
    q = pl.pallas_call(
        functools.partial(_fused_mlp_kernel, compute_dtype=p.compute_dtype),
        out_shape=jax.ShapeDtypeStruct((pB, p.ap), out_dtype),
        grid=(n_steps,),
        in_specs=_make_in_specs(TB, p.input_dim, p.hp, p.ap),
        out_specs=pl.BlockSpec((TB, p.ap), lambda i: (i, 0)),
        compiler_params=pltpu.CompilerParams(dimension_semantics=("parallel",)),
        cost_estimate=pl.CostEstimate(
            flops=flops, transcendentals=0,
            bytes_accessed=in_bytes + pB * p.ap * jnp.dtype(out_dtype).itemsize),
    )(*operands)
    if trim:
        return q[:B, :p.n_actions]
    return q[:B]


def dqn_actions(x, params, *, batch_tile=1024, compute_dtype=jnp.bfloat16):
    """Equivalent of Network.actions(obses): greedy argmax, fused in-kernel."""
    p = _as_prepared(params, compute_dtype)
    operands, B, TB, pB, n_steps, flops, in_bytes = _prep_inputs(x, p, batch_tile)
    a = pl.pallas_call(
        functools.partial(_fused_mlp_argmax_kernel,
                          compute_dtype=p.compute_dtype, n_actions=p.n_actions),
        out_shape=jax.ShapeDtypeStruct((n_steps, 1, TB), jnp.int32),
        grid=(n_steps,),
        in_specs=_make_in_specs(TB, p.input_dim, p.hp, p.ap),
        out_specs=pl.BlockSpec((1, 1, TB), lambda i: (i, 0, 0)),
        compiler_params=pltpu.CompilerParams(dimension_semantics=("parallel",)),
        cost_estimate=pl.CostEstimate(
            flops=flops, transcendentals=0,
            bytes_accessed=in_bytes + pB * 4),
    )(*operands)
    return a.reshape(pB)[:B]


# ---------------------------------------------------------------------------
# Init + pure-JAX reference
# ---------------------------------------------------------------------------
def init_params(key, input_dim, hidden, n_actions):
    """Deterministic parameter init (Kaiming-uniform-ish, like nn.Linear)."""
    ks = jax.random.split(key, 6)

    def lin(kw, kb, fan_in, fan_out):
        bound = 1.0 / jnp.sqrt(jnp.float32(fan_in))
        w = jax.random.uniform(kw, (fan_in, fan_out), jnp.float32, -bound, bound)
        b = jax.random.uniform(kb, (1, fan_out), jnp.float32, -bound, bound)
        return w, b

    w1, b1 = lin(ks[0], ks[1], input_dim, hidden)
    w2, b2 = lin(ks[2], ks[3], hidden, hidden)
    w3, b3 = lin(ks[4], ks[5], hidden, n_actions)
    return (w1, b1, w2, b2, w3, b3)


def _reference_forward(x, params, compute_dtype=jnp.bfloat16):
    """Plain-JAX reference with the same cast-in / f32-accumulate contract."""
    w1, b1, w2, b2, w3, b3 = params
    cd = compute_dtype
    h1 = jnp.maximum(jnp.dot(x.astype(cd), w1.astype(cd),
                             preferred_element_type=jnp.float32) + b1, 0.0)
    h2 = jnp.maximum(jnp.dot(h1.astype(cd), w2.astype(cd),
                             preferred_element_type=jnp.float32) + b2, 0.0)
    return jnp.dot(h2.astype(cd), w3.astype(cd),
                   preferred_element_type=jnp.float32) + b3


# TODO(synk): Network.save / Network.load (msgpack checkpoint I/O) and the
# optimizer / loss factory closures are host-side only — no Pallas equivalent.

if __name__ == "__main__":
    B = 8            # batch of observations
    INPUT_DIM = 32   # traffic-state feature vector length
    HIDDEN = 64      # padded to 128 inside prepare_params
    N_ACTIONS = 8    # traffic-light phases (output padded to 128, sliced back)

    key = jax.random.PRNGKey(0)
    k_x, k_p = jax.random.split(key)

    x = jax.random.normal(k_x, (B, INPUT_DIM), dtype=jnp.float32)
    raw_params = init_params(k_p, INPUT_DIM, HIDDEN, N_ACTIONS)

    # One-time (hoisted) weight padding / bf16 cast.
    params = prepare_params(raw_params, compute_dtype=jnp.bfloat16)

    # --- small batch: single grid step ------------------------------------
    q = jax.block_until_ready(dqn_forward(x, params))
    acts = jax.block_until_ready(dqn_actions(x, params))
    q_ref = _reference_forward(x, raw_params)
    assert q.shape == (B, N_ACTIONS)
    assert acts.shape == (B,)
    assert jnp.allclose(q, q_ref, atol=1e-3, rtol=1e-3)
    assert jnp.array_equal(acts, jnp.argmax(q, axis=-1))

    # --- non-multiple batch, multi-step even grid (padding + pipeline path) -
    x2 = jax.random.normal(jax.random.PRNGKey(1), (50, INPUT_DIM), dtype=jnp.float32)
    q2 = jax.block_until_ready(dqn_forward(x2, params, batch_tile=16))
    a2 = jax.block_until_ready(dqn_actions(x2, params, batch_tile=16))
    q2_ref = _reference_forward(x2, raw_params)
    assert q2.shape == (50, N_ACTIONS) and a2.shape == (50,)
    assert jnp.allclose(q2, q2_ref, atol=1e-3, rtol=1e-3)
    assert jnp.array_equal(a2, jnp.argmax(q2, axis=-1))

    # --- float32 escape hatch (exact PyTorch-dtype semantics) --------------
    params32 = prepare_params(raw_params, compute_dtype=jnp.float32)
    q3 = jax.block_until_ready(dqn_forward(x, params32))
    q3_ref = _reference_forward(x, raw_params, compute_dtype=jnp.float32)
    assert jnp.allclose(q3, q3_ref, atol=1e-5, rtol=1e-5)

    print("KERNEL_OK")
</pallas_src>

<mosaic_0001>
module attributes {stable_mosaic.version = 11 : i64} {
  func.func @_fused_mlp_kernel(%arg0: i32, %arg1: memref<8x32xbf16, #tpu.memory_space<vmem>>, %arg2: memref<32x128xbf16, #tpu.memory_space<vmem>>, %arg3: memref<1x128xf32, #tpu.memory_space<vmem>>, %arg4: memref<128x128xbf16, #tpu.memory_space<vmem>>, %arg5: memref<1x128xf32, #tpu.memory_space<vmem>>, %arg6: memref<128x128xbf16, #tpu.memory_space<vmem>>, %arg7: memref<1x128xf32, #tpu.memory_space<vmem>>, %arg8: memref<8x128xf32, #tpu.memory_space<vmem>>) attributes {dimension_semantics = [#tpu.dimension_semantics<parallel>], iteration_bounds = array<i64: 1>, scalar_prefetch = 0 : i64, scratch_operands = 0 : i64, tpu.core_type = #tpu.core_type<tc>, window_params = [{transform_indices = @transform_0, window_bounds = array<i64: 8, 32>}, {pipeline_mode = #tpu.pipeline_mode<synchronous>, transform_indices = @transform_1, window_bounds = array<i64: 32, 128>}, {pipeline_mode = #tpu.pipeline_mode<synchronous>, transform_indices = @transform_2, window_bounds = array<i64: 1, 128>}, {pipeline_mode = #tpu.pipeline_mode<synchronous>, transform_indices = @transform_3, window_bounds = array<i64: 128, 128>}, {pipeline_mode = #tpu.pipeline_mode<synchronous>, transform_indices = @transform_4, window_bounds = array<i64: 1, 128>}, {pipeline_mode = #tpu.pipeline_mode<synchronous>, transform_indices = @transform_5, window_bounds = array<i64: 128, 128>}, {pipeline_mode = #tpu.pipeline_mode<synchronous>, transform_indices = @transform_6, window_bounds = array<i64: 1, 128>}, {transform_indices = @transform_7, window_bounds = array<i64: 8, 128>}]} {
    %c0 = arith.constant 0 : index
    %c0_0 = arith.constant 0 : index
    %0 = vector.load %arg1[%c0, %c0_0] : memref<8x32xbf16, #tpu.memory_space<vmem>>, vector<8x32xbf16>
    %c0_1 = arith.constant 0 : index
    %c0_2 = arith.constant 0 : index
    %1 = vector.load %arg2[%c0_1, %c0_2] : memref<32x128xbf16, #tpu.memory_space<vmem>>, vector<32x128xbf16>
    %c0_3 = arith.constant 0 : index
    %c0_4 = arith.constant 0 : index
    %2 = vector.load %arg3[%c0_3, %c0_4] : memref<1x128xf32, #tpu.memory_space<vmem>>, vector<1x128xf32>
    %c0_5 = arith.constant 0 : index
    %c0_6 = arith.constant 0 : index
    %3 = vector.load %arg4[%c0_5, %c0_6] : memref<128x128xbf16, #tpu.memory_space<vmem>>, vector<128x128xbf16>
    %c0_7 = arith.constant 0 : index
    %c0_8 = arith.constant 0 : index
    %4 = vector.load %arg5[%c0_7, %c0_8] : memref<1x128xf32, #tpu.memory_space<vmem>>, vector<1x128xf32>
    %c0_9 = arith.constant 0 : index
    %c0_10 = arith.constant 0 : index
    %5 = vector.load %arg6[%c0_9, %c0_10] : memref<128x128xbf16, #tpu.memory_space<vmem>>, vector<128x128xbf16>
    %c0_11 = arith.constant 0 : index
    %c0_12 = arith.constant 0 : index
    %6 = vector.load %arg7[%c0_11, %c0_12] : memref<1x128xf32, #tpu.memory_space<vmem>>, vector<1x128xf32>
    %cst = arith.constant dense<0.000000e+00> : vector<8x128xf32>
    %7 = tpu.matmul %0, %1, %cst {dimension_numbers = #tpu.dot_dimension_numbers<[1], [0], [0], [1], [0, 0, 1, 1], [], []>} : vector<8x32xbf16>, vector<32x128xbf16>, vector<8x128xf32> -> vector<8x128xf32>
    %8 = vector.broadcast %2 : vector<1x128xf32> to vector<8x128xf32>
    %9 = arith.addf %7, %8 : vector<8x128xf32>
    %cst_13 = arith.constant 0.000000e+00 : f32
    %10 = vector.broadcast %cst_13 : f32 to vector<8x128xf32>
    %11 = arith.maximumf %9, %10 : vector<8x128xf32>
    %12 = arith.truncf %11 : vector<8x128xf32> to vector<8x128xbf16>
    %cst_14 = arith.constant dense<0.000000e+00> : vector<8x128xf32>
    %13 = tpu.matmul %12, %3, %cst_14 {dimension_numbers = #tpu.dot_dimension_numbers<[1], [0], [0], [1], [0, 0, 1, 1], [], []>} : vector<8x128xbf16>, vector<128x128xbf16>, vector<8x128xf32> -> vector<8x128xf32>
    %14 = vector.broadcast %4 : vector<1x128xf32> to vector<8x128xf32>
    %15 = arith.addf %13, %14 : vector<8x128xf32>
    %cst_15 = arith.constant 0.000000e+00 : f32
    %16 = vector.broadcast %cst_15 : f32 to vector<8x128xf32>
    %17 = arith.maximumf %15, %16 : vector<8x128xf32>
    %18 = arith.truncf %17 : vector<8x128xf32> to vector<8x128xbf16>
    %cst_16 = arith.constant dense<0.000000e+00> : vector<8x128xf32>
    %19 = tpu.matmul %18, %5, %cst_16 {dimension_numbers = #tpu.dot_dimension_numbers<[1], [0], [0], [1], [0, 0, 1, 1], [], []>} : vector<8x128xbf16>, vector<128x128xbf16>, vector<8x128xf32> -> vector<8x128xf32>
    %20 = vector.broadcast %6 : vector<1x128xf32> to vector<8x128xf32>
    %21 = arith.addf %19, %20 : vector<8x128xf32>
    %c0_17 = arith.constant 0 : index
    %c0_18 = arith.constant 0 : index
    %22 = vector.load %arg8[%c0_17, %c0_18] : memref<8x128xf32, #tpu.memory_space<vmem>>, vector<8x128xf32>
    tpu.vector_store %arg8[%c0_17, %c0_18], %21 {strides = array<i32>} : memref<8x128xf32, #tpu.memory_space<vmem>>, vector<8x128xf32>,
    return
  }
  func.func @transform_0(%arg0: i32) -> (i32, i32) {
    %c0_i32 = arith.constant 0 : i32
    %c0_i32_0 = arith.constant 0 : i32
    return %arg0, %c0_i32 : i32, i32
  }
  func.func @transform_1(%arg0: i32) -> (i32, i32) {
    %c0_i32 = arith.constant 0 : i32
    %c0_i32_0 = arith.constant 0 : i32
    %c0_i32_1 = arith.constant 0 : i32
    return %c0_i32, %c0_i32_0 : i32, i32
  }
  func.func @transform_2(%arg0: i32) -> (i32, i32) {
    %c0_i32 = arith.constant 0 : i32
    %c0_i32_0 = arith.constant 0 : i32
    %c0_i32_1 = arith.constant 0 : i32
    return %c0_i32, %c0_i32_0 : i32, i32
  }
  func.func @transform_3(%arg0: i32) -> (i32, i32) {
    %c0_i32 = arith.constant 0 : i32
    %c0_i32_0 = arith.constant 0 : i32
    %c0_i32_1 = arith.constant 0 : i32
    return %c0_i32, %c0_i32_0 : i32, i32
  }
  func.func @transform_4(%arg0: i32) -> (i32, i32) {
    %c0_i32 = arith.constant 0 : i32
    %c0_i32_0 = arith.constant 0 : i32
    %c0_i32_1 = arith.constant 0 : i32
    return %c0_i32, %c0_i32_0 : i32, i32
  }
  func.func @transform_5(%arg0: i32) -> (i32, i32) {
    %c0_i32 = arith.constant 0 : i32
    %c0_i32_0 = arith.constant 0 : i32
    %c0_i32_1 = arith.constant 0 : i32
    return %c0_i32, %c0_i32_0 : i32, i32
  }
  func.func @transform_6(%arg0: i32) -> (i32, i32) {
    %c0_i32 = arith.constant 0 : i32
    %c0_i32_0 = arith.constant 0 : i32
    %c0_i32_1 = arith.constant 0 : i32
    return %c0_i32, %c0_i32_0 : i32, i32
  }
  func.func @transform_7(%arg0: i32) -> (i32, i32) {
    %c0_i32 = arith.constant 0 : i32
    %c0_i32_0 = arith.constant 0 : i32
    return %arg0, %c0_i32 : i32, i32
  }
}

</mosaic_0001>

<llo_original>
// kernel: tpu_custom_call.1
$region0: #{tpu_custom_call.1}
  #allocation0 [shape = 'u32[]', space=smem, size = 0x4, offset = 0x4, fixed_abs, tag = 'smem constant byte address 0x4 - core index']
  #allocation1 [shape = 'u32[144,128]{1,0:T(1,128)}', space=vmem, size = 0x12000, scoped, tag = 'internal scratch']
  %s0 = inlined_call_operand.hbm [shape: bf16[8,32], index: 0, kind: input, shape index: {}]
  %s1 = inlined_call_operand.hbm [shape: bf16[32,128], index: 1, kind: input, shape index: {}]
  %s2 = inlined_call_operand.vmem [shape: f32[1,128], index: 2, kind: input, shape index: {}]
  %s3 = inlined_call_operand.hbm [shape: bf16[128,128], index: 3, kind: input, shape index: {}]
  %s4 = inlined_call_operand.vmem [shape: f32[1,128], index: 4, kind: input, shape index: {}]
  %s5 = inlined_call_operand.hbm [shape: bf16[128,128], index: 5, kind: input, shape index: {}]
  %s6 = inlined_call_operand.vmem [shape: f32[1,128], index: 6, kind: input, shape index: {}]
  %s7 = inlined_call_operand.hbm [shape: f32[8,128], index: 7, kind: output, shape index: {}]
  %s8 = sld [smem:[#allocation0]]
  $region54: #{tpu_custom_call.1} parent=0
    _
  %s10 = ssub.s32 1, %s8
  %s11 = scalar_select 0, %s10, %s8
  $region1: #{tpu_custom_call.1} parent=0
    #allocation2 [shape = 'u8[2048]{0}', space=vmem, size = 0x800, scoped, tag = 'input window, operand 0, single buffered']
    #allocation3 [shape = 's32[1]{0}', space=sflag, size = 0x4, scoped, tag = 'scoped memory for tpu_custom_call.1']
    #allocation4 [shape = 's32[1]{0}', space=sflag, size = 0x4, scoped, tag = 'scoped memory for tpu_custom_call.1']
    #allocation5 [shape = 'u8[8192]{0}', space=vmem, size = 0x2000, scoped, tag = 'input window, operand 1, single buffered']
    #allocation6 [shape = 's32[1]{0}', space=sflag, size = 0x4, scoped, tag = 'scoped memory for tpu_custom_call.1']
    #allocation7 [shape = 'u8[32768]{0}', space=vmem, size = 0x8000, scoped, tag = 'input window, operand 3, single buffered']
    #allocation8 [shape = 'u8[32768]{0}', space=vmem, size = 0x8000, scoped, tag = 'input window, operand 5, single buffered']
    #allocation9 [shape = 's32[1]{0}', space=sflag, size = 0x4, scoped, tag = 'scoped memory for tpu_custom_call.1']
    #allocation10 [shape = 'u8[4096]{0}', space=vmem, size = 0x1000, scoped, tag = 'output window, operand 0, single buffered']
    %12 = vsyncpa [#allocation3], 0
    %13 = vsyncpa [#allocation6], 0
    %14 = vsyncpa [#allocation9], 0
    %15 = vsyncpa [#allocation4], 0
    // Predicated region
    $region2: #{tpu_custom_call.1} parent=1 // pred_check
      _
    $region3: #{tpu_custom_call.1} parent=1 // pred_check_branch
      %17 = sbr.rel (0) target = $region5
    $region4: #{tpu_custom_call.1} parent=1 // pred_region
      %s19 = ssub.s32 64, 64
      %20 = vsyncadd [#allocation3], %s19
      %s22 = sshll.u32 [#allocation2], 4
      %s23 = int_to_ptr.vmem [resolvable:$true] %s22
      %25 = dma.hbm_to_vmem [thread:$0]  %s0, 64, %s23, [#allocation3]
    $region5: #{tpu_custom_call.1} parent=1 // pred_fallthru
      _
    // Predicated region
    $region6: #{tpu_custom_call.1} parent=1 // pred_check
      _
    $region7: #{tpu_custom_call.1} parent=1 // pred_check_branch
      %27 = sbr.rel (0) target = $region9
    $region8: #{tpu_custom_call.1} parent=1 // pred_region
      %s29 = ssub.s32 256, 256
      %30 = vsyncadd [#allocation6], %s29
      %s31 = sshll.u32 [#allocation5], 4
      %s32 = int_to_ptr.vmem [resolvable:$true] %s31
      %37 = dma.hbm_to_vmem [thread:$0]  %s1, 256, %s32, [#allocation6], 64, 64, 4
    $region9: #{tpu_custom_call.1} parent=1 // pred_fallthru
      _
    // Predicated region
    $region10: #{tpu_custom_call.1} parent=1 // pred_check
      _
    $region11: #{tpu_custom_call.1} parent=1 // pred_check_branch
      %39 = sbr.rel (0) target = $region13
    $region12: #{tpu_custom_call.1} parent=1 // pred_region
      _
    $region13: #{tpu_custom_call.1} parent=1 // pred_fallthru
      _
    // Predicated region
    $region14: #{tpu_custom_call.1} parent=1 // pred_check
      _
    $region15: #{tpu_custom_call.1} parent=1 // pred_check_branch
      %41 = sbr.rel (0) target = $region17
    $region16: #{tpu_custom_call.1} parent=1 // pred_region
      %s43 = ssub.s32 1024, 1024
      %44 = vsyncadd [#allocation6], %s43
      %s45 = sshll.u32 [#allocation7], 4
      %s46 = int_to_ptr.vmem [resolvable:$true] %s45
      %51 = dma.hbm_to_vmem [thread:$0]  %s3, 1024, %s46, [#allocation6], 64, 64, 4
    $region17: #{tpu_custom_call.1} parent=1 // pred_fallthru
      _
    // Predicated region
    $region18: #{tpu_custom_call.1} parent=1 // pred_check
      _
    $region19: #{tpu_custom_call.1} parent=1 // pred_check_branch
      %53 = sbr.rel (0) target = $region21
    $region20: #{tpu_custom_call.1} parent=1 // pred_region
      _
    $region21: #{tpu_custom_call.1} parent=1 // pred_fallthru
      _
    // Predicated region
    $region22: #{tpu_custom_call.1} parent=1 // pred_check
      _
    $region23: #{tpu_custom_call.1} parent=1 // pred_check_branch
      %55 = sbr.rel (0) target = $region25
    $region24: #{tpu_custom_call.1} parent=1 // pred_region
      %s57 = ssub.s32 1024, 1024
      %58 = vsyncadd [#allocation9], %s57
      %s59 = sshll.u32 [#allocation8], 4
      %s60 = int_to_ptr.vmem [resolvable:$true] %s59
      %65 = dma.hbm_to_vmem [thread:$0]  %s5, 1024, %s60, [#allocation9], 64, 64, 4
    $region25: #{tpu_custom_call.1} parent=1 // pred_fallthru
      _
    // Predicated region
    $region26: #{tpu_custom_call.1} parent=1 // pred_check
      _
    $region27: #{tpu_custom_call.1} parent=1 // pred_check_branch
      %67 = sbr.rel (0) target = $region29
    $region28: #{tpu_custom_call.1} parent=1 // pred_region
      _
    $region29: #{tpu_custom_call.1} parent=1 // pred_fallthru
      _
    // Predicated region
    $region30: #{tpu_custom_call.1} parent=1 // pred_check
      _
    $region31: #{tpu_custom_call.1} parent=1 // pred_check_branch
      %69 = sbr.rel (0) target = $region33
    $region32: #{tpu_custom_call.1} parent=1 // pred_region
      %70 = dma.done [#allocation3], 64
    $region33: #{tpu_custom_call.1} parent=1 // pred_fallthru
      _
    // Predicated region
    $region34: #{tpu_custom_call.1} parent=1 // pred_check
      _
    $region35: #{tpu_custom_call.1} parent=1 // pred_check_branch
      %72 = sbr.rel (0) target = $region37
    $region36: #{tpu_custom_call.1} parent=1 // pred_region
      %73 = dma.done [#allocation6], 256
    $region37: #{tpu_custom_call.1} parent=1 // pred_fallthru
      _
    // Predicated region
    $region38: #{tpu_custom_call.1} parent=1 // pred_check
      _
    $region39: #{tpu_custom_call.1} parent=1 // pred_check_branch
      %75 = sbr.rel (0) target = $region41
    $region40: #{tpu_custom_call.1} parent=1 // pred_region
      %76 = dma.done [#allocation6], 1024
    $region41: #{tpu_custom_call.1} parent=1 // pred_fallthru
      _
    // Predicated region
    $region42: #{tpu_custom_call.1} parent=1 // pred_check
      _
    $region43: #{tpu_custom_call.1} parent=1 // pred_check_branch
      %78 = sbr.rel (0) target = $region45
    $region44: #{tpu_custom_call.1} parent=1 // pred_region
      %79 = dma.done [#allocation9], 1024
    $region45: #{tpu_custom_call.1} parent=1 // pred_fallthru
      _
    %v81 = vld [vmem:[#allocation2] sm:$0xf]
    %v82 = vld [vmem:[#allocation5] sm:$0xf]
    %v83 = vld [vmem:[#allocation5 + $0x4] sm:$0xf]
    %v84 = vld [vmem:[#allocation5 + $0x8] sm:$0xf]
    %v85 = vld [vmem:[#allocation5 + $0xc] sm:$0xf]
    %v86 = vld [vmem:[%s2] sm:$0x1]
    %v87 = vld [vmem:[#allocation7] sm:$0xf]
    %v88 = vld [vmem:[#allocation7 + $0x4] sm:$0xf]
    %v89 = vld [vmem:[#allocation7 + $0x8] sm:$0xf]
    %v90 = vld [vmem:[#allocation7 + $0xc] sm:$0xf]
    %v91 = vld [vmem:[#allocation7 + $0x10] sm:$0xf]
    %v92 = vld [vmem:[#allocation7 + $0x14] sm:$0xf]
    %v93 = vld [vmem:[#allocation7 + $0x18] sm:$0xf]
    %v94 = vld [vmem:[#allocation7 + $0x1c] sm:$0xf]
    %v95 = vld [vmem:[#allocation7 + $0x20] sm:$0xf]
    %v96 = vld [vmem:[#allocation7 + $0x24] sm:$0xf]
    %v97 = vld [vmem:[#allocation7 + $0x28] sm:$0xf]
    %v98 = vld [vmem:[#allocation7 + $0x2c] sm:$0xf]
    %v99 = vld [vmem:[#allocation7 + $0x30] sm:$0xf]
    %v100 = vld [vmem:[#allocation7 + $0x34] sm:$0xf]
    %v101 = vld [vmem:[#allocation7 + $0x38] sm:$0xf]
    %v102 = vld [vmem:[#allocation7 + $0x3c] sm:$0xf]
    %v103 = vld [vmem:[%s4] sm:$0x1]
    %v104 = vld [vmem:[#allocation8] sm:$0xf]
    %v105 = vld [vmem:[#allocation8 + $0x4] sm:$0xf]
    %v106 = vld [vmem:[#allocation8 + $0x8] sm:$0xf]
    %v107 = vld [vmem:[#allocation8 + $0xc] sm:$0xf]
    %v108 = vld [vmem:[#allocation8 + $0x10] sm:$0xf]
    %v109 = vld [vmem:[#allocation8 + $0x14] sm:$0xf]
    %v110 = vld [vmem:[#allocation8 + $0x18] sm:$0xf]
    %v111 = vld [vmem:[#allocation8 + $0x1c] sm:$0xf]
    %v112 = vld [vmem:[#allocation8 + $0x20] sm:$0xf]
    %v113 = vld [vmem:[#allocation8 + $0x24] sm:$0xf]
    %v114 = vld [vmem:[#allocation8 + $0x28] sm:$0xf]
    %v115 = vld [vmem:[#allocation8 + $0x2c] sm:$0xf]
    %v116 = vld [vmem:[#allocation8 + $0x30] sm:$0xf]
    %v117 = vld [vmem:[#allocation8 + $0x34] sm:$0xf]
    %v118 = vld [vmem:[#allocation8 + $0x38] sm:$0xf]
    %v119 = vld [vmem:[#allocation8 + $0x3c] sm:$0xf]
    %v120 = vld [vmem:[%s6] sm:$0x1]
    %v122 = vlaneseq
    %v123 = vshrl.u32 %v122, 7
    %v124 = vsub.s32 0, %v123
    %v125 = vrot.slane %v86, %v124
    %v131 = vunpack.c.l.b16 %v82
    %v132 = vunpack.c.l.b16 %v83
    %v133 = vunpack.c.l.b16 %v84
    %v134 = vunpack.c.l.b16 %v85
    %v135 = vpack.c.b16 %v132, %v131
    %v136 = vpack.c.b16 %v134, %v133
    %vm139 = vcmask 261120
    %v141 = vsel %vm139, %v81, 0
    %143 = vmatprep.subr.bf16.mxu0 0
    %144 = vmatpush1.bf16.msra.mxu0 %v135
    %145 = vmatprep.subr.bf16.mxu0 0
    %146 = vmatpush1.bf16.msra.mxu0 %v136
    %147 = vmatprep.subr.bf16.mxu0 0
    %148 = vmatpush1.bf16.msra.mxu0 0
    %149 = vmatprep.subr.bf16.mxu0 0
    %150 = vmatpush1.bf16.msra.mxu0 0
    %151 = vmatprep.subr.bf16.mxu0 0
    %152 = vmatpush1.bf16.msra.mxu0 0
    %153 = vmatprep.subr.bf16.mxu0 0
    %154 = vmatpush1.bf16.msra.mxu0 0
    %155 = vmatprep.subr.bf16.mxu0 0
    %156 = vmatpush1.bf16.msra.mxu0 0
    %157 = vmatprep.subr.bf16.mxu0 0
    %158 = vmatpush1.bf16.msra.mxu0 0
    %159 = vmatprep.subr.bf16.mxu0 0
    %160 = vmatpush1.bf16.msra.mxu0 0
    %161 = vmatprep.subr.bf16.mxu0 0
    %162 = vmatpush1.bf16.msra.mxu0 0
    %163 = vmatprep.subr.bf16.mxu0 0
    %164 = vmatpush1.bf16.msra.mxu0 0
    %165 = vmatprep.subr.bf16.mxu0 0
    %166 = vmatpush1.bf16.msra.mxu0 0
    %167 = vmatprep.subr.bf16.mxu0 0
    %168 = vmatpush1.bf16.msra.mxu0 0
    %169 = vmatprep.subr.bf16.mxu0 0
    %170 = vmatpush1.bf16.msra.mxu0 0
    %171 = vmatprep.subr.bf16.mxu0 0
    %172 = vmatpush1.bf16.msra.mxu0 0
    %173 = vmatprep.subr.bf16.mxu0 0
    %174 = vmatpush1.bf16.msra.mxu0 0
    %175 = vmatprep.mubr.bf16.mxu0 0
    %176 = vmatmul.mubr.bf16.gmra.mrb[0].mxu0 %v141
    %v177 = vpop.f32.mrb[0].mxu0
    %v178 = vadd.f32 %v125, %v177
    %v179 = vpop.f32.mrb[0].mxu0
    %v180 = vpop.f32.mrb[0].mxu0
    %v181 = vpop.f32.mrb[0].mxu0
    %182 = vdwg.mxu0
    %v183 = vmax.f32 %v178, 0.0
    %v184 = vpack.c.bf16 %v183, %v183
    %v186 = vlaneseq
    %v187 = vshrl.u32 %v186, 7
    %v188 = vsub.s32 0, %v187
    %v189 = vrot.slane %v103, %v188
    %v207 = vunpack.c.l.b16 %v87
    %v208 = vunpack.c.l.b16 %v88
    %v209 = vunpack.c.l.b16 %v89
    %v210 = vunpack.c.l.b16 %v90
    %v211 = vunpack.c.l.b16 %v91
    %v212 = vunpack.c.l.b16 %v92
    %v213 = vunpack.c.l.b16 %v93
    %v214 = vunpack.c.l.b16 %v94
    %v215 = vunpack.c.l.b16 %v95
    %v216 = vunpack.c.l.b16 %v96
    %v217 = vunpack.c.l.b16 %v97
    %v218 = vunpack.c.l.b16 %v98
    %v219 = vunpack.c.l.b16 %v99
    %v220 = vunpack.c.l.b16 %v100
    %v221 = vunpack.c.l.b16 %v101
    %v222 = vunpack.c.l.b16 %v102
    %v223 = vpack.c.b16 %v208, %v207
    %v224 = vpack.c.b16 %v210, %v209
    %v225 = vpack.c.b16 %v212, %v211
    %v226 = vpack.c.b16 %v214, %v213
    %v227 = vpack.c.b16 %v216, %v215
    %v228 = vpack.c.b16 %v218, %v217
    %v229 = vpack.c.b16 %v220, %v219
    %v230 = vpack.c.b16 %v222, %v221
    %239 = vmatprep.subr.bf16.mxu0 0
    %240 = vmatpush1.bf16.msra.mxu0 %v223
    %241 = vmatprep.subr.bf16.mxu0 0
    %242 = vmatpush1.bf16.msra.mxu0 %v224
    %243 = vmatprep.subr.bf16.mxu0 0
    %244 = vmatpush1.bf16.msra.mxu0 %v225
    %245 = vmatprep.subr.bf16.mxu0 0
    %246 = vmatpush1.bf16.msra.mxu0 %v226
    %247 = vmatprep.subr.bf16.mxu0 0
    %248 = vmatpush1.bf16.msra.mxu0 %v227
    %249 = vmatprep.subr.bf16.mxu0 0
    %250 = vmatpush1.bf16.msra.mxu0 %v228
    %251 = vmatprep.subr.bf16.mxu0 0
    %252 = vmatpush1.bf16.msra.mxu0 %v229
    %253 = vmatprep.subr.bf16.mxu0 0
    %254 = vmatpush1.bf16.msra.mxu0 %v230
    %255 = vmatprep.subr.bf16.mxu0 0
    %256 = vmatpush1.bf16.msra.mxu0 0
    %257 = vmatprep.subr.bf16.mxu0 0
    %258 = vmatpush1.bf16.msra.mxu0 0
    %259 = vmatprep.subr.bf16.mxu0 0
    %260 = vmatpush1.bf16.msra.mxu0 0
    %261 = vmatprep.subr.bf16.mxu0 0
    %262 = vmatpush1.bf16.msra.mxu0 0
    %263 = vmatprep.subr.bf16.mxu0 0
    %264 = vmatpush1.bf16.msra.mxu0 0
    %265 = vmatprep.subr.bf16.mxu0 0
    %266 = vmatpush1.bf16.msra.mxu0 0
    %267 = vmatprep.subr.bf16.mxu0 0
    %268 = vmatpush1.bf16.msra.mxu0 0
    %269 = vmatprep.subr.bf16.mxu0 0
    %270 = vmatpush1.bf16.msra.mxu0 0
    %271 = vmatprep.mubr.bf16.mxu0 0
    %272 = vmatmul.mubr.bf16.gmra.mrb[0].mxu0 %v184
    %v273 = vpop.f32.mrb[0].mxu0
    %v274 = vadd.f32 %v189, %v273
    %v275 = vpop.f32.mrb[0].mxu0
    %v276 = vpop.f32.mrb[0].mxu0
    %v277 = vpop.f32.mrb[0].mxu0
    %278 = vdwg.mxu0
    %v279 = vmax.f32 %v274, 0.0
    %v280 = vpack.c.bf16 %v279, %v279
    %v282 = vlaneseq
    %v283 = vshrl.u32 %v282, 7
    %v284 = vsub.s32 0, %v283
    %v285 = vrot.slane %v120, %v284
    %v303 = vunpack.c.l.b16 %v104
    %v304 = vunpack.c.l.b16 %v105
    %v305 = vunpack.c.l.b16 %v106
    %v306 = vunpack.c.l.b16 %v107
    %v307 = vunpack.c.l.b16 %v108
    %v308 = vunpack.c.l.b16 %v109
    %v309 = vunpack.c.l.b16 %v110
    %v310 = vunpack.c.l.b16 %v111
    %v311 = vunpack.c.l.b16 %v112
    %v312 = vunpack.c.l.b16 %v113
    %v313 = vunpack.c.l.b16 %v114
    %v314 = vunpack.c.l.b16 %v115
    %v315 = vunpack.c.l.b16 %v116
    %v316 = vunpack.c.l.b16 %v117
    %v317 = vunpack.c.l.b16 %v118
    %v318 = vunpack.c.l.b16 %v119
    %v319 = vpack.c.b16 %v304, %v303
    %v320 = vpack.c.b16 %v306, %v305
    %v321 = vpack.c.b16 %v308, %v307
    %v322 = vpack.c.b16 %v310, %v309
    %v323 = vpack.c.b16 %v312, %v311
    %v324 = vpack.c.b16 %v314, %v313
    %v325 = vpack.c.b16 %v316, %v315
    %v326 = vpack.c.b16 %v318, %v317
    %335 = vmatprep.subr.bf16.mxu0 0
    %336 = vmatpush1.bf16.msra.mxu0 %v319
    %337 = vmatprep.subr.bf16.mxu0 0
    %338 = vmatpush1.bf16.msra.mxu0 %v320
    %339 = vmatprep.subr.bf16.mxu0 0
    %340 = vmatpush1.bf16.msra.mxu0 %v321
    %341 = vmatprep.subr.bf16.mxu0 0
    %342 = vmatpush1.bf16.msra.mxu0 %v322
    %343 = vmatprep.subr.bf16.mxu0 0
    %344 = vmatpush1.bf16.msra.mxu0 %v323
    %345 = vmatprep.subr.bf16.mxu0 0
    %346 = vmatpush1.bf16.msra.mxu0 %v324
    %347 = vmatprep.subr.bf16.mxu0 0
    %348 = vmatpush1.bf16.msra.mxu0 %v325
    %349 = vmatprep.subr.bf16.mxu0 0
    %350 = vmatpush1.bf16.msra.mxu0 %v326
    %351 = vmatprep.subr.bf16.mxu0 0
    %352 = vmatpush1.bf16.msra.mxu0 0
    %353 = vmatprep.subr.bf16.mxu0 0
    %354 = vmatpush1.bf16.msra.mxu0 0
    %355 = vmatprep.subr.bf16.mxu0 0
    %356 = vmatpush1.bf16.msra.mxu0 0
    %357 = vmatprep.subr.bf16.mxu0 0
    %358 = vmatpush1.bf16.msra.mxu0 0
    %359 = vmatprep.subr.bf16.mxu0 0
    %360 = vmatpush1.bf16.msra.mxu0 0
    %361 = vmatprep.subr.bf16.mxu0 0
    %362 = vmatpush1.bf16.msra.mxu0 0
    %363 = vmatprep.subr.bf16.mxu0 0
    %364 = vmatpush1.bf16.msra.mxu0 0
    %365 = vmatprep.subr.bf16.mxu0 0
    %366 = vmatpush1.bf16.msra.mxu0 0
    %367 = vmatprep.mubr.bf16.mxu0 0
    %368 = vmatmul.mubr.bf16.gmra.mrb[0].mxu0 %v280
    %v369 = vpop.f32.mrb[0].mxu0
    %v370 = vadd.f32 %v285, %v369
    %v371 = vpop.f32.mrb[0].mxu0
    %v372 = vpop.f32.mrb[0].mxu0
    %v373 = vpop.f32.mrb[0].mxu0
    %374 = vdwg.mxu0
    %375 = vst [vmem:[#allocation10] sm:$0xff] %v370
    // Predicated region
    $region46: #{tpu_custom_call.1} parent=1 // pred_check
      _
    $region47: #{tpu_custom_call.1} parent=1 // pred_check_branch
      %377 = sbr.rel (0) target = $region49
    $region48: #{tpu_custom_call.1} parent=1 // pred_region
      %s379 = ssub.s32 128, 128
      %380 = vsyncadd [#allocation4], %s379
      %s382 = sshll.u32 [#allocation10], 4
      %s383 = int_to_ptr.vmem [resolvable:$true] %s382
      %385 = dma.vmem_to_hbm [thread:$0]  %s383, 128, %s7, [#allocation4]
    $region49: #{tpu_custom_call.1} parent=1 // pred_fallthru
      _
    // Predicated region
    $region50: #{tpu_custom_call.1} parent=1 // pred_check
      _
    $region51: #{tpu_custom_call.1} parent=1 // pred_check_branch
      %387 = sbr.rel (0) target = $region53
    $region52: #{tpu_custom_call.1} parent=1 // pred_region
      %388 = dma.done [#allocation4], 128
    $region53: #{tpu_custom_call.1} parent=1 // pred_fallthru
      _
    %389 = vsyncpa [#allocation3], 1
    %390 = vsyncpa [#allocation6], 1
    %391 = vsyncpa [#allocation9], 1
    %392 = vsyncpa [#allocation4], 1

</llo_original>
